<compile_context>
chip_gen: v7x
topology: tpu7x:2x2x1
jax: 0.10.0
libtpu: 0.0.40
codegen_flags: <defaults>
</compile_context>

<pallas_src>
import functools

import jax
import jax.numpy as jnp
from jax.experimental import pallas as pl
from jax.experimental.pallas import tpu as pltpu

INPUT_SIZE = 13
HIDDEN_SIZE = 100
OUTPUT_SIZE = 3
BATCH = 8

_HIDDEN_PAD = 128          # lane-aligned hidden dim
_OUT_PAD = 128             # lane-aligned logits dim (lane-dense stores, full MXU N)
_ROW_TILE = 2048           # batch tile for the gridded (large-batch) path
_SINGLE_BLOCK_ROWS = 4 * _ROW_TILE   # below this, one whole-array block (no grid)
_NEG_BIG = -1.0e30         # finite "-inf" for padded logit lanes


def mlp_kernel(x_ref, w1_ref, b1_ref, w2_ref, b2_ref, o_ref):
    # fc1: (B, in) @ (in, hidden_pad) + (1, hidden_pad)
    h = jnp.dot(x_ref[...], w1_ref[...], preferred_element_type=jnp.float32)
    h = h + b1_ref[...]
    # sigmoid: exp goes to the EUP slot (no explicit f32 divide on the VALU path)
    h = jax.nn.sigmoid(h)
    # fc2: (B, hidden_pad) @ (hidden_pad, out_pad) + (1, out_pad)
    # Padded hidden rows of w2 are zero (the 0.5 sigmoid padding lanes contribute
    # nothing); padded output lanes get b2 = -1e30, so exp(shifted) == 0 there and
    # the log_softmax of the real lanes is exact.
    logits = jnp.dot(h, w2_ref[...], preferred_element_type=jnp.float32)
    logits = logits + b2_ref[...]
    # log_softmax along dim=1 (last axis), numerically stable
    m = jnp.max(logits, axis=-1, keepdims=True)
    shifted = logits - m
    lse = jnp.log(jnp.sum(jnp.exp(shifted), axis=-1, keepdims=True))
    o_ref[...] = (shifted - lse).astype(o_ref.dtype)


def prepare_params(w1, b1, w2, b2, hidden_pad=_HIDDEN_PAD, out_pad=_OUT_PAD):
    """Pad weights ONCE, outside the per-call hot path.

    * hidden 100 -> 128: zero-padded w1 cols / b1 lanes feed zero rows of w2,
      so the result is exactly equivalent.
    * output 3 -> 128: zero-padded w2 cols; padded b2 lanes = -1e30 (finite!)
      so they vanish from the softmax normalizer without producing NaNs.
    """
    in_dim, hidden = w1.shape
    out_dim = w2.shape[1]
    hp = max(hidden_pad, ((hidden + 127) // 128) * 128)
    op = max(out_pad, ((out_dim + 127) // 128) * 128)
    w1p = jnp.zeros((in_dim, hp), w1.dtype).at[:, :hidden].set(w1)
    b1p = jnp.zeros((1, hp), b1.dtype).at[:, :hidden].set(jnp.reshape(b1, (1, -1)))
    w2p = jnp.zeros((hp, op), w2.dtype).at[:hidden, :out_dim].set(w2)
    b2p = jnp.full((1, op), _NEG_BIG, b2.dtype).at[:, :out_dim].set(
        jnp.reshape(b2, (1, -1)))
    return w1p, b1p, w2p, b2p


def net_forward(x, w1p, b1p, w2p, b2p, output_size=OUTPUT_SIZE,
                row_tile=_ROW_TILE, single_block_rows=_SINGLE_BLOCK_ROWS):
    """Forward pass. Expects weights already padded by prepare_params."""
    batch, in_dim = x.shape
    hidden = w1p.shape[1]
    out_pad = w2p.shape[1]

    if batch <= single_block_rows:
        # Small/medium batch: single whole-array block resident in VMEM.
        # No grid, no pipeline prologue/epilogue, no index-map scalar code.
        out = pl.pallas_call(
            mlp_kernel,
            out_shape=jax.ShapeDtypeStruct((batch, out_pad), jnp.float32),
            in_specs=[pl.BlockSpec(memory_space=pltpu.MemorySpace.VMEM)] * 5,
            out_specs=pl.BlockSpec(memory_space=pltpu.MemorySpace.VMEM),
        )(x, w1p, b1p, w2p, b2p)
    else:
        # Large batch: grid over 2K-row tiles; ragged last block handled by
        # Pallas (OOB rows produce garbage that is never written back), so no
        # jnp.pad copy of x and no output row slicing.  Weights/biases map to
        # block (0, 0) every step -> DMA'd once and kept resident.
        grid = (pl.cdiv(batch, row_tile),)
        out = pl.pallas_call(
            mlp_kernel,
            out_shape=jax.ShapeDtypeStruct((batch, out_pad), jnp.float32),
            grid=grid,
            in_specs=[
                pl.BlockSpec((row_tile, in_dim), lambda i: (i, 0)),
                pl.BlockSpec((in_dim, hidden), lambda i: (0, 0)),
                pl.BlockSpec((1, hidden), lambda i: (0, 0)),
                pl.BlockSpec((hidden, out_pad), lambda i: (0, 0)),
                pl.BlockSpec((1, out_pad), lambda i: (0, 0)),
            ],
            out_specs=pl.BlockSpec((row_tile, out_pad), lambda i: (i, 0)),
            compiler_params=pltpu.CompilerParams(
                dimension_semantics=("parallel",),   # v7x megacore; no-op on v5e/v6e
            ),
        )(x, w1p, b1p, w2p, b2p)

    # Lane-dense kernel output -> user-visible (batch, output_size) logits.
    return out[:, :output_size]


def init_params(key):
    # Deterministic init mirroring nn.Linear's U(-1/sqrt(fan_in), 1/sqrt(fan_in)).
    k1, k2, k3, k4 = jax.random.split(key, 4)
    bound1 = 1.0 / jnp.sqrt(float(INPUT_SIZE))
    bound2 = 1.0 / jnp.sqrt(float(HIDDEN_SIZE))
    w1 = jax.random.uniform(k1, (INPUT_SIZE, HIDDEN_SIZE), jnp.float32, -bound1, bound1)
    b1 = jax.random.uniform(k2, (1, HIDDEN_SIZE), jnp.float32, -bound1, bound1)
    w2 = jax.random.uniform(k3, (HIDDEN_SIZE, OUTPUT_SIZE), jnp.float32, -bound2, bound2)
    b2 = jax.random.uniform(k4, (1, OUTPUT_SIZE), jnp.float32, -bound2, bound2)
    return w1, b1, w2, b2


def reference_forward(x, w1, b1, w2, b2):
    h = jax.nn.sigmoid(x @ w1 + b1)
    logits = h @ w2 + b2
    return jax.nn.log_softmax(logits, axis=1)


if __name__ == "__main__":
    key = jax.random.PRNGKey(0)
    kx, kp = jax.random.split(key)
    x = jax.random.normal(kx, (BATCH, INPUT_SIZE), jnp.float32)
    w1, b1, w2, b2 = init_params(kp)

    # Pad weights once, outside the forward hot path.
    w1p, b1p, w2p, b2p = prepare_params(w1, b1, w2, b2)

    # Small-batch (single-block) path.
    out = jax.block_until_ready(net_forward(x, w1p, b1p, w2p, b2p))
    ref = reference_forward(x, w1, b1, w2, b2)
    assert out.shape == (BATCH, OUTPUT_SIZE)
    assert jnp.allclose(out, ref, atol=1e-5, rtol=1e-5), "small-batch mismatch vs JAX reference"

    # Also exercise the gridded path (with a ragged last block) at a cheap size
    # by shrinking the row tile for this test only.
    xb = jax.random.normal(jax.random.PRNGKey(1), (100, INPUT_SIZE), jnp.float32)
    outb = jax.block_until_ready(
        net_forward(xb, w1p, b1p, w2p, b2p, row_tile=32, single_block_rows=0))
    refb = reference_forward(xb, w1, b1, w2, b2)
    assert outb.shape == (100, OUTPUT_SIZE)
    assert jnp.allclose(outb, refb, atol=1e-5, rtol=1e-5), "gridded-path mismatch vs JAX reference"

    print("KERNEL_OK")
</pallas_src>

<mosaic_0001>
module attributes {stable_mosaic.version = 11 : i64} {
  func.func @mlp_kernel(%arg0: memref<8x13xf32, #tpu.memory_space<vmem>>, %arg1: memref<13x128xf32, #tpu.memory_space<vmem>>, %arg2: memref<1x128xf32, #tpu.memory_space<vmem>>, %arg3: memref<128x128xf32, #tpu.memory_space<vmem>>, %arg4: memref<1x128xf32, #tpu.memory_space<vmem>>, %arg5: memref<8x128xf32, #tpu.memory_space<vmem>>) attributes {dimension_semantics = [], scalar_prefetch = 0 : i64, scratch_operands = 0 : i64, tpu.core_type = #tpu.core_type<tc>} {
    %c0 = arith.constant 0 : index
    %c0_0 = arith.constant 0 : index
    %0 = vector.load %arg0[%c0, %c0_0] : memref<8x13xf32, #tpu.memory_space<vmem>>, vector<8x13xf32>
    %c0_1 = arith.constant 0 : index
    %c0_2 = arith.constant 0 : index
    %1 = vector.load %arg1[%c0_1, %c0_2] : memref<13x128xf32, #tpu.memory_space<vmem>>, vector<13x128xf32>
    %cst = arith.constant dense<0.000000e+00> : vector<8x128xf32>
    %2 = tpu.matmul %0, %1, %cst {dimension_numbers = #tpu.dot_dimension_numbers<[1], [0], [0], [1], [0, 0, 1, 1], [], []>} : vector<8x13xf32>, vector<13x128xf32>, vector<8x128xf32> -> vector<8x128xf32>
    %c0_3 = arith.constant 0 : index
    %c0_4 = arith.constant 0 : index
    %3 = vector.load %arg2[%c0_3, %c0_4] : memref<1x128xf32, #tpu.memory_space<vmem>>, vector<1x128xf32>
    %4 = vector.broadcast %3 : vector<1x128xf32> to vector<8x128xf32>
    %5 = arith.addf %2, %4 : vector<8x128xf32>
    %6 = arith.negf %5 : vector<8x128xf32>
    %7 = math.exp %6 : vector<8x128xf32>
    %cst_5 = arith.constant 1.000000e+00 : f32
    %8 = vector.broadcast %cst_5 : f32 to vector<8x128xf32>
    %9 = arith.addf %8, %7 : vector<8x128xf32>
    %10 = arith.divf %8, %9 : vector<8x128xf32>
    %c0_6 = arith.constant 0 : index
    %c0_7 = arith.constant 0 : index
    %11 = vector.load %arg3[%c0_6, %c0_7] : memref<128x128xf32, #tpu.memory_space<vmem>>, vector<128x128xf32>
    %cst_8 = arith.constant dense<0.000000e+00> : vector<8x128xf32>
    %12 = tpu.matmul %10, %11, %cst_8 {dimension_numbers = #tpu.dot_dimension_numbers<[1], [0], [0], [1], [0, 0, 1, 1], [], []>} : vector<8x128xf32>, vector<128x128xf32>, vector<8x128xf32> -> vector<8x128xf32>
    %c0_9 = arith.constant 0 : index
    %c0_10 = arith.constant 0 : index
    %13 = vector.load %arg4[%c0_9, %c0_10] : memref<1x128xf32, #tpu.memory_space<vmem>>, vector<1x128xf32>
    %14 = vector.broadcast %13 : vector<1x128xf32> to vector<8x128xf32>
    %15 = arith.addf %12, %14 : vector<8x128xf32>
    %cst_11 = arith.constant dense<0xFF800000> : vector<8xf32>
    %16 = vector.multi_reduction <maximumf>, %15, %cst_11 [1] : vector<8x128xf32> to vector<8xf32>
    %17 = vector.shape_cast %16 : vector<8xf32> to vector<8x1xf32>
    %18 = vector.broadcast %17 : vector<8x1xf32> to vector<8x128xf32>
    %19 = arith.subf %15, %18 : vector<8x128xf32>
    %20 = math.exp %19 : vector<8x128xf32>
    %cst_12 = arith.constant dense<0.000000e+00> : vector<8xf32>
    %21 = vector.multi_reduction <add>, %20, %cst_12 [1] : vector<8x128xf32> to vector<8xf32>
    %22 = vector.shape_cast %21 : vector<8xf32> to vector<8x1xf32>
    %23 = math.log %22 : vector<8x1xf32>
    %24 = vector.broadcast %23 : vector<8x1xf32> to vector<8x128xf32>
    %25 = arith.subf %19, %24 : vector<8x128xf32>
    %c0_13 = arith.constant 0 : index
    %c0_14 = arith.constant 0 : index
    %26 = vector.load %arg5[%c0_13, %c0_14] : memref<8x128xf32, #tpu.memory_space<vmem>>, vector<8x128xf32>
    tpu.vector_store %arg5[%c0_13, %c0_14], %25 {strides = array<i32>} : memref<8x128xf32, #tpu.memory_space<vmem>>, vector<8x128xf32>,
    return
  }
}

</mosaic_0001>

<llo_original>
// kernel: tpu_custom_call.1
$region0: #{tpu_custom_call.1}
  #allocation0 [shape = 'u32[]', space=smem, size = 0x4, offset = 0x4, fixed_abs, tag = 'smem constant byte address 0x4 - core index']
  #allocation1 [shape = 'u32[144,128]{1,0:T(1,128)}', space=vmem, size = 0x12000, scoped, tag = 'internal scratch']
  %s0 = inlined_call_operand.hbm [shape: f32[8,13], index: 0, kind: input, shape index: {}]
  %s1 = inlined_call_operand.hbm [shape: f32[13,128], index: 1, kind: input, shape index: {}]
  %s2 = inlined_call_operand.vmem [shape: f32[1,128], index: 2, kind: input, shape index: {}]
  %s3 = inlined_call_operand.hbm [shape: f32[128,128], index: 3, kind: input, shape index: {}]
  %s4 = inlined_call_operand.vmem [shape: f32[1,128], index: 4, kind: input, shape index: {}]
  %s5 = inlined_call_operand.hbm [shape: f32[8,128], index: 5, kind: output, shape index: {}]
  %s6 = sld [smem:[#allocation0]]
  $region42: #{tpu_custom_call.1} parent=0
    _
  %s8 = ssub.s32 1, %s6
  %s9 = scalar_select 0, %s8, %s6
  $region1: #{tpu_custom_call.1} parent=0
    #allocation2 [shape = 'u8[4096]{0}', space=vmem, size = 0x1000, scoped, tag = 'input window, operand 0, single buffered']
    #allocation3 [shape = 's32[1]{0}', space=sflag, size = 0x4, scoped, tag = 'scoped memory for tpu_custom_call.1']
    #allocation4 [shape = 's32[1]{0}', space=sflag, size = 0x4, scoped, tag = 'scoped memory for tpu_custom_call.1']
    #allocation5 [shape = 'u8[8192]{0}', space=vmem, size = 0x2000, scoped, tag = 'input window, operand 1, single buffered']
    #allocation6 [shape = 's32[1]{0}', space=sflag, size = 0x4, scoped, tag = 'scoped memory for tpu_custom_call.1']
    #allocation7 [shape = 'u8[65536]{0}', space=vmem, size = 0x10000, scoped, tag = 'input window, operand 3, single buffered']
    #allocation8 [shape = 'u8[4096]{0}', space=vmem, size = 0x1000, scoped, tag = 'output window, operand 0, single buffered']
    %10 = vsyncpa [#allocation3], 0
    %11 = vsyncpa [#allocation6], 0
    %12 = vsyncpa [#allocation4], 0
    // Predicated region
    $region2: #{tpu_custom_call.1} parent=1 // pred_check
      _
    $region3: #{tpu_custom_call.1} parent=1 // pred_check_branch
      %14 = sbr.rel (0) target = $region5
    $region4: #{tpu_custom_call.1} parent=1 // pred_region
      %s16 = ssub.s32 128, 128
      %17 = vsyncadd [#allocation3], %s16
      %s19 = sshll.u32 [#allocation2], 4
      %s20 = int_to_ptr.vmem [resolvable:$true] %s19
      %22 = dma.hbm_to_vmem [thread:$0]  %s0, 128, %s20, [#allocation3]
    $region5: #{tpu_custom_call.1} parent=1 // pred_fallthru
      _
    // Predicated region
    $region6: #{tpu_custom_call.1} parent=1 // pred_check
      _
    $region7: #{tpu_custom_call.1} parent=1 // pred_check_branch
      %24 = sbr.rel (0) target = $region9
    $region8: #{tpu_custom_call.1} parent=1 // pred_region
      %s26 = ssub.s32 256, 256
      %27 = vsyncadd [#allocation6], %s26
      %s28 = sshll.u32 [#allocation5], 4
      %s29 = int_to_ptr.vmem [resolvable:$true] %s28
      %34 = dma.hbm_to_vmem [thread:$0]  %s1, 256, %s29, [#allocation6], 128, 128, 8
    $region9: #{tpu_custom_call.1} parent=1 // pred_fallthru
      _
    // Predicated region
    $region10: #{tpu_custom_call.1} parent=1 // pred_check
      _
    $region11: #{tpu_custom_call.1} parent=1 // pred_check_branch
      %36 = sbr.rel (0) target = $region13
    $region12: #{tpu_custom_call.1} parent=1 // pred_region
      _
    $region13: #{tpu_custom_call.1} parent=1 // pred_fallthru
      _
    // Predicated region
    $region14: #{tpu_custom_call.1} parent=1 // pred_check
      _
    $region15: #{tpu_custom_call.1} parent=1 // pred_check_branch
      %38 = sbr.rel (0) target = $region17
    $region16: #{tpu_custom_call.1} parent=1 // pred_region
      %s40 = ssub.s32 2048, 2048
      %41 = vsyncadd [#allocation6], %s40
      %s42 = sshll.u32 [#allocation7], 4
      %s43 = int_to_ptr.vmem [resolvable:$true] %s42
      %48 = dma.hbm_to_vmem [thread:$0]  %s3, 2048, %s43, [#allocation6], 128, 128, 8
    $region17: #{tpu_custom_call.1} parent=1 // pred_fallthru
      _
    // Predicated region
    $region18: #{tpu_custom_call.1} parent=1 // pred_check
      _
    $region19: #{tpu_custom_call.1} parent=1 // pred_check_branch
      %50 = sbr.rel (0) target = $region21
    $region20: #{tpu_custom_call.1} parent=1 // pred_region
      _
    $region21: #{tpu_custom_call.1} parent=1 // pred_fallthru
      _
    // Predicated region
    $region22: #{tpu_custom_call.1} parent=1 // pred_check
      _
    $region23: #{tpu_custom_call.1} parent=1 // pred_check_branch
      %52 = sbr.rel (0) target = $region25
    $region24: #{tpu_custom_call.1} parent=1 // pred_region
      %53 = dma.done [#allocation3], 128
    $region25: #{tpu_custom_call.1} parent=1 // pred_fallthru
      _
    // Predicated region
    $region26: #{tpu_custom_call.1} parent=1 // pred_check
      _
    $region27: #{tpu_custom_call.1} parent=1 // pred_check_branch
      %55 = sbr.rel (0) target = $region29
    $region28: #{tpu_custom_call.1} parent=1 // pred_region
      %56 = dma.done [#allocation6], 256
    $region29: #{tpu_custom_call.1} parent=1 // pred_fallthru
      _
    // Predicated region
    $region30: #{tpu_custom_call.1} parent=1 // pred_check
      _
    $region31: #{tpu_custom_call.1} parent=1 // pred_check_branch
      %58 = sbr.rel (0) target = $region33
    $region32: #{tpu_custom_call.1} parent=1 // pred_region
      %59 = dma.done [#allocation6], 2048
    $region33: #{tpu_custom_call.1} parent=1 // pred_fallthru
      _
    %v60 = vld [vmem:[#allocation2] sm:$0xff]
    %v61 = vld [vmem:[#allocation5] sm:$0xff]
    %v62 = vld [vmem:[#allocation5 + $0x8] sm:$0x1f]
    %v63 = vld [vmem:[%s2] sm:$0x1]
    %v65 = vlaneseq
    %v66 = vshrl.u32 %v65, 7
    %v67 = vsub.s32 0, %v66
    %v68 = vrot.slane %v63, %v67
    %vm70 = vcmask 105472
    %v72 = vsel %vm70, %v60, 0
    %vm74 = vcmask 1044480
    %v76 = vsel %vm74, %v62, 0
    %78 = vmatprep.subr.mxu0 0.0
    %79 = vmatpush1.msra.mxu0 %v61
    %80 = vmatprep.subr.mxu0 0.0
    %81 = vmatpush1.msra.mxu0 %v76
    %82 = vmatprep.subr.mxu0 0.0
    %83 = vmatpush1.msra.mxu0 0.0
    %84 = vmatprep.subr.mxu0 0.0
    %85 = vmatpush1.msra.mxu0 0.0
    %86 = vmatprep.subr.mxu0 0.0
    %87 = vmatpush1.msra.mxu0 0.0
    %88 = vmatprep.subr.mxu0 0.0
    %89 = vmatpush1.msra.mxu0 0.0
    %90 = vmatprep.subr.mxu0 0.0
    %91 = vmatpush1.msra.mxu0 0.0
    %92 = vmatprep.subr.mxu0 0.0
    %93 = vmatpush1.msra.mxu0 0.0
    %94 = vmatprep.subr.mxu0 0.0
    %95 = vmatpush1.msra.mxu0 0.0
    %96 = vmatprep.subr.mxu0 0.0
    %97 = vmatpush1.msra.mxu0 0.0
    %98 = vmatprep.subr.mxu0 0.0
    %99 = vmatpush1.msra.mxu0 0.0
    %100 = vmatprep.subr.mxu0 0.0
    %101 = vmatpush1.msra.mxu0 0.0
    %102 = vmatprep.subr.mxu0 0.0
    %103 = vmatpush1.msra.mxu0 0.0
    %104 = vmatprep.subr.mxu0 0.0
    %105 = vmatpush1.msra.mxu0 0.0
    %106 = vmatprep.subr.mxu0 0.0
    %107 = vmatpush1.msra.mxu0 0.0
    %108 = vmatprep.subr.mxu0 0.0
    %109 = vmatpush1.msra.mxu0 0.0
    %110 = vmatprep.subr.mxu0 0.0
    %111 = vmatpush1.msra.mxu0 0.0
    %112 = vmatprep.subr.mxu0 0.0
    %113 = vmatpush1.msra.mxu0 0.0
    %114 = vmatprep.subr.mxu0 0.0
    %115 = vmatpush1.msra.mxu0 0.0
    %116 = vmatprep.subr.mxu0 0.0
    %117 = vmatpush1.msra.mxu0 0.0
    %118 = vmatprep.subr.mxu0 0.0
    %119 = vmatpush1.msra.mxu0 0.0
    %120 = vmatprep.subr.mxu0 0.0
    %121 = vmatpush1.msra.mxu0 0.0
    %122 = vmatprep.subr.mxu0 0.0
    %123 = vmatpush1.msra.mxu0 0.0
    %124 = vmatprep.subr.mxu0 0.0
    %125 = vmatpush1.msra.mxu0 0.0
    %126 = vmatprep.subr.mxu0 0.0
    %127 = vmatpush1.msra.mxu0 0.0
    %128 = vmatprep.subr.mxu0 0.0
    %129 = vmatpush1.msra.mxu0 0.0
    %130 = vmatprep.subr.mxu0 0.0
    %131 = vmatpush1.msra.mxu0 0.0
    %132 = vmatprep.subr.mxu0 0.0
    %133 = vmatpush1.msra.mxu0 0.0
    %134 = vmatprep.subr.mxu0 0.0
    %135 = vmatpush1.msra.mxu0 0.0
    %136 = vmatprep.subr.mxu0 0.0
    %137 = vmatpush1.msra.mxu0 0.0
    %138 = vmatprep.subr.mxu0 0.0
    %139 = vmatpush1.msra.mxu0 0.0
    %140 = vmatprep.subr.mxu0 0.0
    %141 = vmatpush1.msra.mxu0 0.0
    %142 = vmatprep.mubr.f32.mxu0 0.0
    %143 = vmatmul.mubr.f32.gmra.mrb[0].mxu0 %v72
    %v144 = vpop.f32.mrb[0].mxu0
    %v145 = vadd.f32 %v68, %v144
    %v146 = vpop.f32.mrb[0].mxu0
    %147 = vdwg.mxu0
    %v148 = vxor.u32 %v145, 2147483648
    %v149 = vmul.f32 %v148, 1.442695
    %v150 = vpow.pop %v149
    %v151 = vadd.f32 %v150, 1.0
    %v152 = vrcp.pop %v151
    %v153 = vmul.f32 1.0, %v152
    %v154 = vld [vmem:[#allocation7] sm:$0xff]
    %v155 = vld [vmem:[#allocation7 + $0x8] sm:$0xff]
    %v156 = vld [vmem:[#allocation7 + $0x10] sm:$0xff]
    %v157 = vld [vmem:[#allocation7 + $0x18] sm:$0xff]
    %v158 = vld [vmem:[#allocation7 + $0x20] sm:$0xff]
    %v159 = vld [vmem:[#allocation7 + $0x28] sm:$0xff]
    %v160 = vld [vmem:[#allocation7 + $0x30] sm:$0xff]
    %v161 = vld [vmem:[#allocation7 + $0x38] sm:$0xff]
    %v162 = vld [vmem:[#allocation7 + $0x40] sm:$0xff]
    %v163 = vld [vmem:[#allocation7 + $0x48] sm:$0xff]
    %v164 = vld [vmem:[#allocation7 + $0x50] sm:$0xff]
    %v165 = vld [vmem:[#allocation7 + $0x58] sm:$0xff]
    %v166 = vld [vmem:[#allocation7 + $0x60] sm:$0xff]
    %v167 = vld [vmem:[#allocation7 + $0x68] sm:$0xff]
    %v168 = vld [vmem:[#allocation7 + $0x70] sm:$0xff]
    %v169 = vld [vmem:[#allocation7 + $0x78] sm:$0xff]
    %v170 = vld [vmem:[%s4] sm:$0x1]
    %v172 = vlaneseq
    %v173 = vshrl.u32 %v172, 7
    %v174 = vsub.s32 0, %v173
    %v175 = vrot.slane %v170, %v174
    %177 = vmatprep.subr.mxu0 0.0
    %178 = vmatpush1.msra.mxu0 %v154
    %179 = vmatprep.subr.mxu0 0.0
    %180 = vmatpush1.msra.mxu0 %v155
    %181 = vmatprep.subr.mxu0 0.0
    %182 = vmatpush1.msra.mxu0 %v156
    %183 = vmatprep.subr.mxu0 0.0
    %184 = vmatpush1.msra.mxu0 %v157
    %185 = vmatprep.subr.mxu0 0.0
    %186 = vmatpush1.msra.mxu0 %v158
    %187 = vmatprep.subr.mxu0 0.0
    %188 = vmatpush1.msra.mxu0 %v159
    %189 = vmatprep.subr.mxu0 0.0
    %190 = vmatpush1.msra.mxu0 %v160
    %191 = vmatprep.subr.mxu0 0.0
    %192 = vmatpush1.msra.mxu0 %v161
    %193 = vmatprep.subr.mxu0 0.0
    %194 = vmatpush1.msra.mxu0 %v162
    %195 = vmatprep.subr.mxu0 0.0
    %196 = vmatpush1.msra.mxu0 %v163
    %197 = vmatprep.subr.mxu0 0.0
    %198 = vmatpush1.msra.mxu0 %v164
    %199 = vmatprep.subr.mxu0 0.0
    %200 = vmatpush1.msra.mxu0 %v165
    %201 = vmatprep.subr.mxu0 0.0
    %202 = vmatpush1.msra.mxu0 %v166
    %203 = vmatprep.subr.mxu0 0.0
    %204 = vmatpush1.msra.mxu0 %v167
    %205 = vmatprep.subr.mxu0 0.0
    %206 = vmatpush1.msra.mxu0 %v168
    %207 = vmatprep.subr.mxu0 0.0
    %208 = vmatpush1.msra.mxu0 %v169
    %209 = vmatprep.subr.mxu0 0.0
    %210 = vmatpush1.msra.mxu0 0.0
    %211 = vmatprep.subr.mxu0 0.0
    %212 = vmatpush1.msra.mxu0 0.0
    %213 = vmatprep.subr.mxu0 0.0
    %214 = vmatpush1.msra.mxu0 0.0
    %215 = vmatprep.subr.mxu0 0.0
    %216 = vmatpush1.msra.mxu0 0.0
    %217 = vmatprep.subr.mxu0 0.0
    %218 = vmatpush1.msra.mxu0 0.0
    %219 = vmatprep.subr.mxu0 0.0
    %220 = vmatpush1.msra.mxu0 0.0
    %221 = vmatprep.subr.mxu0 0.0
    %222 = vmatpush1.msra.mxu0 0.0
    %223 = vmatprep.subr.mxu0 0.0
    %224 = vmatpush1.msra.mxu0 0.0
    %225 = vmatprep.subr.mxu0 0.0
    %226 = vmatpush1.msra.mxu0 0.0
    %227 = vmatprep.subr.mxu0 0.0
    %228 = vmatpush1.msra.mxu0 0.0
    %229 = vmatprep.subr.mxu0 0.0
    %230 = vmatpush1.msra.mxu0 0.0
    %231 = vmatprep.subr.mxu0 0.0
    %232 = vmatpush1.msra.mxu0 0.0
    %233 = vmatprep.subr.mxu0 0.0
    %234 = vmatpush1.msra.mxu0 0.0
    %235 = vmatprep.subr.mxu0 0.0
    %236 = vmatpush1.msra.mxu0 0.0
    %237 = vmatprep.subr.mxu0 0.0
    %238 = vmatpush1.msra.mxu0 0.0
    %239 = vmatprep.subr.mxu0 0.0
    %240 = vmatpush1.msra.mxu0 0.0
    %241 = vmatprep.mubr.f32.mxu0 0.0
    %242 = vmatmul.mubr.f32.gmra.mrb[0].mxu0 %v153
    %v243 = vpop.f32.mrb[0].mxu0
    %v244 = vadd.f32 %v175, %v243
    %v245 = vpop.f32.mrb[0].mxu0
    %246 = vdwg.mxu0
    %247 = vmax.xlane.f32.xlu0 %v244
    %v248 = vpop.xlane.xlu0 %247
    %v249 = vsub.f32 %v244, %v248
    %v250 = vmul.f32 %v249, 1.442695
    %v251 = vpow.pop %v250
    %252 = vadd.xlane.f32.xlu0 %v251
    %v253 = vpop.xlane.xlu0 %252
    %v254 = vlog2.pop %v253
    %v255 = vmul.f32 %v254, 0.6931472
    %v256 = vsub.f32 %v249, %v255
    %257 = vst [vmem:[#allocation8] sm:$0xff] %v256
    // Predicated region
    $region34: #{tpu_custom_call.1} parent=1 // pred_check
      _
    $region35: #{tpu_custom_call.1} parent=1 // pred_check_branch
      %259 = sbr.rel (0) target = $region37
    $region36: #{tpu_custom_call.1} parent=1 // pred_region
      %s261 = ssub.s32 128, 128
      %262 = vsyncadd [#allocation4], %s261
      %s264 = sshll.u32 [#allocation8], 4
      %s265 = int_to_ptr.vmem [resolvable:$true] %s264
      %267 = dma.vmem_to_hbm [thread:$0]  %s265, 128, %s5, [#allocation4]
    $region37: #{tpu_custom_call.1} parent=1 // pred_fallthru
      _
    // Predicated region
    $region38: #{tpu_custom_call.1} parent=1 // pred_check
      _
    $region39: #{tpu_custom_call.1} parent=1 // pred_check_branch
      %269 = sbr.rel (0) target = $region41
    $region40: #{tpu_custom_call.1} parent=1 // pred_region
      %270 = dma.done [#allocation4], 128
    $region41: #{tpu_custom_call.1} parent=1 // pred_fallthru
      _
    %271 = vsyncpa [#allocation3], 1
    %272 = vsyncpa [#allocation6], 1
    %273 = vsyncpa [#allocation4], 1

</llo_original>
